<compile_context>
chip_gen: v7x
topology: tpu7x:2x2x1
jax: 0.10.0
libtpu: 0.0.40
codegen_flags: <defaults>
</compile_context>

<pallas_src>
import numpy as np
import jax
import jax.numpy as jnp
from jax.experimental import pallas as pl
from jax.experimental.pallas import tpu as pltpu


def make_kernel(TN, C):
    def kernel(x_ref, halo_ref, w_ref, b_ref, o_ref):
        x = x_ref[0].astype(jnp.float32)            # (TN, C) tokens x channels
        halo = halo_ref[0, 0].astype(jnp.float32)   # (2, C): [row before tile, row after tile]
        w = w_ref[...].astype(jnp.float32)          # (3, C) tap-major depthwise weight (w1 has +1 residual folded in)
        b = b_ref[...].astype(jnp.float32)          # (1, C) bias

        hp = halo[0:1, :]                            # previous-row halo (zeros at n == 0)
        hn = halo[1:2, :]                            # next-row halo     (zeros at n == N-1)

        # Neighbour rows via XLU roll; fix only the wrapped boundary row with a mask.
        row = jax.lax.broadcasted_iota(jnp.int32, (TN, 1), 0)
        x_prev = jnp.where(row == 0, hp, pltpu.roll(x, 1, axis=0))               # x[n-1]
        x_next = jnp.where(row == TN - 1, hn, pltpu.roll(x, (TN - 1) % TN, axis=0))  # x[n+1]

        # out[n,c] = w0[c]*x[n-1,c] + (w1[c]+1)*x[n,c] + w2[c]*x[n+1,c] + b[c]
        out = x_prev * w[0:1, :] + x * w[1:2, :] + x_next * w[2:3, :] + b
        o_ref[0] = out.astype(o_ref.dtype)

    return kernel


def _choose_token_tile(n, target):
    """Largest multiple-of-8 divisor of n that is <= target; whole n if small/no divisor."""
    if n <= target:
        return n
    tn = (min(target, n) // 8) * 8
    while tn >= 8:
        if n % tn == 0:
            return tn
        tn -= 8
    return n  # fallback: whole-N block (legal; only hit for awkward N)


def pos_encoding_block(x, conv_w, conv_b, s=1, token_tile=1024):
    """PosEncodingBlock forward (s == 1 path).

    x:       (B, N, C) activations (any float dtype), C == embed_dim (depthwise conv)
    conv_w:  (C, 1, 3) PyTorch depthwise Conv1d weight
    conv_b:  (C,)      Conv1d bias
    """
    if s != 1:
        # TODO(synk): strided (s > 1) path (subsampled output, no residual) not implemented.
        raise NotImplementedError("PosEncodingBlock Pallas kernel supports s == 1 only")

    B, N, C = x.shape
    out_dtype = x.dtype

    # Tap-major depthwise weights; fold the residual into the centre tap.
    w_taps = jnp.transpose(conv_w[:, 0, :], (1, 0)).astype(jnp.float32)   # (3, C)
    w_taps = w_taps.at[1].add(1.0)                                        # residual fold (s == 1)
    bias = conv_b.reshape(1, C).astype(jnp.float32)                       # (1, C)

    # Keep the lane (last) dim a multiple of 128 so stores stay unmasked.
    Cp = ((C + 127) // 128) * 128
    if Cp != C:
        x = jnp.pad(x, ((0, 0), (0, 0), (0, Cp - C)))
        w_taps = jnp.pad(w_taps, ((0, 0), (0, Cp - C)))
        bias = jnp.pad(bias, ((0, 0), (0, Cp - C)))

    TN = _choose_token_tile(N, token_tile)
    NT = N // TN if N % TN == 0 else 1
    if N % TN != 0:
        TN = N
        NT = 1

    # Per-tile halo rows: halo[b, t, 0] = x[b, t*TN - 1] (zeros for t == 0),
    #                     halo[b, t, 1] = x[b, (t+1)*TN] (zeros for last tile).
    zero_row = jnp.zeros((B, 1, Cp), x.dtype)
    prev_rows = jnp.concatenate([zero_row, x[:, TN - 1:N - 1:TN, :]], axis=1)   # (B, NT, Cp)
    next_rows = jnp.concatenate([x[:, TN:N:TN, :], zero_row], axis=1)           # (B, NT, Cp)
    halo = jnp.stack([prev_rows, next_rows], axis=2)                             # (B, NT, 2, Cp)

    kernel = make_kernel(TN, Cp)
    out = pl.pallas_call(
        kernel,
        out_shape=jax.ShapeDtypeStruct((B, N, Cp), out_dtype),
        grid=(B, NT),
        in_specs=[
            pl.BlockSpec((1, TN, Cp), lambda b, t: (b, t, 0)),       # activation tile
            pl.BlockSpec((1, 1, 2, Cp), lambda b, t: (b, t, 0, 0)),  # per-tile halo rows
            pl.BlockSpec((3, Cp), lambda b, t: (0, 0)),              # taps (resident)
            pl.BlockSpec((1, Cp), lambda b, t: (0, 0)),              # bias (resident)
        ],
        out_specs=pl.BlockSpec((1, TN, Cp), lambda b, t: (b, t, 0)),
        compiler_params=pltpu.CompilerParams(
            dimension_semantics=("parallel", "parallel")),
    )(x, halo, w_taps, bias)

    if Cp != C:
        out = out[..., :C]
    return out


def ref_forward(x, conv_w, conv_b, s=1):
    """Pure-JAX reference mirroring the PyTorch forward."""
    B, N, C = x.shape
    xc = jnp.transpose(x, (0, 2, 1)).astype(jnp.float32)                  # (B, C, N)
    conv = jax.lax.conv_general_dilated(
        xc, conv_w.astype(jnp.float32), window_strides=(s,), padding=((1, 1),),
        dimension_numbers=('NCH', 'OIH', 'NCH'),
        feature_group_count=C)
    conv = conv + conv_b[None, :, None]
    if s == 1:
        conv = conv + xc
    return jnp.transpose(conv, (0, 2, 1)).astype(x.dtype)                 # (B, N_out, C)


if __name__ == "__main__":
    # Small shapes consistent with the module: batch=2, tokens=16,
    # in_chans = embed_dim = 128 (module default; lane-dense last dim).
    B, N, C = 2, 16, 128
    key = jax.random.PRNGKey(0)
    k0, k1, k2 = jax.random.split(key, 3)

    x = jax.random.normal(k0, (B, N, C), jnp.float32)
    conv_w = jax.random.normal(k1, (C, 1, 3), jnp.float32) * 0.2   # depthwise weight
    conv_b = jax.random.normal(k2, (C,), jnp.float32) * 0.2

    ref = ref_forward(x, conv_w, conv_b, s=1)

    # Default path (single token tile at this small N).
    out_whole = jax.block_until_ready(pos_encoding_block(x, conv_w, conv_b, s=1))
    # Forced multi-tile path: exercises the halo handling across tile boundaries.
    out_tiled = jax.block_until_ready(pos_encoding_block(x, conv_w, conv_b, s=1, token_tile=8))

    for out in (out_whole, out_tiled):
        if not np.allclose(np.asarray(out), np.asarray(ref), rtol=1e-5, atol=1e-5):
            max_err = float(np.max(np.abs(np.asarray(out) - np.asarray(ref))))
            raise AssertionError(f"Pallas/reference mismatch, max abs err = {max_err}")
    print("KERNEL_OK")
</pallas_src>

<mosaic_0001>
module attributes {stable_mosaic.version = 11 : i64} {
  func.func @kernel(%arg0: i32, %arg1: i32, %arg2: memref<1x16x128xf32, #tpu.memory_space<vmem>>, %arg3: memref<1x1x2x128xf32, #tpu.memory_space<vmem>>, %arg4: memref<3x128xf32, #tpu.memory_space<vmem>>, %arg5: memref<1x128xf32, #tpu.memory_space<vmem>>, %arg6: memref<1x16x128xf32, #tpu.memory_space<vmem>>) attributes {dimension_semantics = [#tpu.dimension_semantics<parallel>, #tpu.dimension_semantics<parallel>], iteration_bounds = array<i64: 2, 1>, scalar_prefetch = 0 : i64, scratch_operands = 0 : i64, tpu.core_type = #tpu.core_type<tc>, window_params = [{transform_indices = @transform_0, window_bounds = array<i64: 1, 16, 128>}, {transform_indices = @transform_1, window_bounds = array<i64: 1, 1, 2, 128>}, {pipeline_mode = #tpu.pipeline_mode<synchronous>, transform_indices = @transform_2, window_bounds = array<i64: 3, 128>}, {pipeline_mode = #tpu.pipeline_mode<synchronous>, transform_indices = @transform_3, window_bounds = array<i64: 1, 128>}, {transform_indices = @transform_4, window_bounds = array<i64: 1, 16, 128>}]} {
    %c0 = arith.constant 0 : index
    %c0_0 = arith.constant 0 : index
    %c0_1 = arith.constant 0 : index
    %0 = vector.load %arg2[%c0, %c0_0, %c0_1] : memref<1x16x128xf32, #tpu.memory_space<vmem>>, vector<1x16x128xf32>
    %1 = vector.shape_cast %0 : vector<1x16x128xf32> to vector<16x128xf32>
    %c0_2 = arith.constant 0 : index
    %c0_3 = arith.constant 0 : index
    %c0_4 = arith.constant 0 : index
    %c0_5 = arith.constant 0 : index
    %2 = vector.load %arg3[%c0_2, %c0_3, %c0_4, %c0_5] : memref<1x1x2x128xf32, #tpu.memory_space<vmem>>, vector<1x1x2x128xf32>
    %3 = vector.shape_cast %2 : vector<1x1x2x128xf32> to vector<2x128xf32>
    %c0_6 = arith.constant 0 : index
    %c0_7 = arith.constant 0 : index
    %4 = vector.load %arg4[%c0_6, %c0_7] : memref<3x128xf32, #tpu.memory_space<vmem>>, vector<3x128xf32>
    %c0_8 = arith.constant 0 : index
    %c0_9 = arith.constant 0 : index
    %5 = vector.load %arg5[%c0_8, %c0_9] : memref<1x128xf32, #tpu.memory_space<vmem>>, vector<1x128xf32>
    %6 = vector.extract_strided_slice %3 {offsets = [0, 0], sizes = [1, 128], strides = [1, 1]} : vector<2x128xf32> to vector<1x128xf32>
    %7 = vector.extract_strided_slice %3 {offsets = [1, 0], sizes = [1, 128], strides = [1, 1]} : vector<2x128xf32> to vector<1x128xf32>
    %8 = tpu.iota {dimensions = array<i32: 0>} : vector<16x1xi32>
    %c0_i32 = arith.constant 0 : i32
    %9 = vector.broadcast %c0_i32 : i32 to vector<16x1xi32>
    %10 = arith.cmpi eq, %8, %9 : vector<16x1xi32>
    %c1_i32 = arith.constant 1 : i32
    %11 = tpu.dynamic_rotate %1 by %c1_i32 dim 0 : vector<16x128xf32>, i32 -> vector<16x128xf32>
    %12 = vector.shape_cast %10 : vector<16x1xi1> to vector<16x1xi1>
    %13 = vector.broadcast %12 : vector<16x1xi1> to vector<16x128xi1>
    %14 = vector.shape_cast %6 : vector<1x128xf32> to vector<1x128xf32>
    %15 = vector.broadcast %14 : vector<1x128xf32> to vector<16x128xf32>
    %16 = arith.select %13, %15, %11 : vector<16x128xi1>, vector<16x128xf32>
    %c15_i32 = arith.constant 15 : i32
    %17 = vector.broadcast %c15_i32 : i32 to vector<16x1xi32>
    %18 = arith.cmpi eq, %8, %17 : vector<16x1xi32>
    %c15_i32_10 = arith.constant 15 : i32
    %19 = tpu.dynamic_rotate %1 by %c15_i32_10 dim 0 : vector<16x128xf32>, i32 -> vector<16x128xf32>
    %20 = vector.shape_cast %18 : vector<16x1xi1> to vector<16x1xi1>
    %21 = vector.broadcast %20 : vector<16x1xi1> to vector<16x128xi1>
    %22 = vector.shape_cast %7 : vector<1x128xf32> to vector<1x128xf32>
    %23 = vector.broadcast %22 : vector<1x128xf32> to vector<16x128xf32>
    %24 = arith.select %21, %23, %19 : vector<16x128xi1>, vector<16x128xf32>
    %25 = vector.extract_strided_slice %4 {offsets = [0, 0], sizes = [1, 128], strides = [1, 1]} : vector<3x128xf32> to vector<1x128xf32>
    %26 = vector.broadcast %25 : vector<1x128xf32> to vector<16x128xf32>
    %27 = arith.mulf %16, %26 : vector<16x128xf32>
    %28 = vector.extract_strided_slice %4 {offsets = [1, 0], sizes = [1, 128], strides = [1, 1]} : vector<3x128xf32> to vector<1x128xf32>
    %29 = vector.broadcast %28 : vector<1x128xf32> to vector<16x128xf32>
    %30 = arith.mulf %1, %29 : vector<16x128xf32>
    %31 = arith.addf %27, %30 : vector<16x128xf32>
    %32 = vector.extract_strided_slice %4 {offsets = [2, 0], sizes = [1, 128], strides = [1, 1]} : vector<3x128xf32> to vector<1x128xf32>
    %33 = vector.broadcast %32 : vector<1x128xf32> to vector<16x128xf32>
    %34 = arith.mulf %24, %33 : vector<16x128xf32>
    %35 = arith.addf %31, %34 : vector<16x128xf32>
    %36 = vector.broadcast %5 : vector<1x128xf32> to vector<16x128xf32>
    %37 = arith.addf %35, %36 : vector<16x128xf32>
    %c0_11 = arith.constant 0 : index
    %c0_12 = arith.constant 0 : index
    %c0_13 = arith.constant 0 : index
    %38 = vector.load %arg6[%c0_11, %c0_12, %c0_13] : memref<1x16x128xf32, #tpu.memory_space<vmem>>, vector<1x16x128xf32>
    %39 = vector.shape_cast %38 : vector<1x16x128xf32> to vector<16x128xf32>
    %40 = vector.shape_cast %37 : vector<16x128xf32> to vector<1x16x128xf32>
    tpu.vector_store %arg6[%c0_11, %c0_12, %c0_13], %40 {strides = array<i32>} : memref<1x16x128xf32, #tpu.memory_space<vmem>>, vector<1x16x128xf32>,
    return
  }
  func.func @transform_0(%arg0: i32, %arg1: i32) -> (i32, i32, i32) {
    %c0_i32 = arith.constant 0 : i32
    %c0_i32_0 = arith.constant 0 : i32
    return %arg0, %arg1, %c0_i32 : i32, i32, i32
  }
  func.func @transform_1(%arg0: i32, %arg1: i32) -> (i32, i32, i32, i32) {
    %c0_i32 = arith.constant 0 : i32
    %c0_i32_0 = arith.constant 0 : i32
    %c0_i32_1 = arith.constant 0 : i32
    return %arg0, %arg1, %c0_i32, %c0_i32_0 : i32, i32, i32, i32
  }
  func.func @transform_2(%arg0: i32, %arg1: i32) -> (i32, i32) {
    %c0_i32 = arith.constant 0 : i32
    %c0_i32_0 = arith.constant 0 : i32
    %c0_i32_1 = arith.constant 0 : i32
    return %c0_i32, %c0_i32_0 : i32, i32
  }
  func.func @transform_3(%arg0: i32, %arg1: i32) -> (i32, i32) {
    %c0_i32 = arith.constant 0 : i32
    %c0_i32_0 = arith.constant 0 : i32
    %c0_i32_1 = arith.constant 0 : i32
    return %c0_i32, %c0_i32_0 : i32, i32
  }
  func.func @transform_4(%arg0: i32, %arg1: i32) -> (i32, i32, i32) {
    %c0_i32 = arith.constant 0 : i32
    %c0_i32_0 = arith.constant 0 : i32
    return %arg0, %arg1, %c0_i32 : i32, i32, i32
  }
}

</mosaic_0001>

<llo_original>
// kernel: tpu_custom_call.1
$region0: #{tpu_custom_call.1}
  #allocation0 [shape = 'u32[]', space=smem, size = 0x4, offset = 0x4, fixed_abs, tag = 'smem constant byte address 0x4 - core index']
  #allocation1 [shape = 'u32[144,128]{1,0:T(1,128)}', space=vmem, size = 0x12000, scoped, tag = 'internal scratch']
  %s0 = inlined_call_operand.hbm [shape: f32[2,16,128], index: 0, kind: input, shape index: {}]
  %s1 = inlined_call_operand.hbm [shape: f32[2,1,2,128], index: 1, kind: input, shape index: {}]
  %s2 = inlined_call_operand.vmem [shape: f32[3,128], index: 2, kind: input, shape index: {}]
  %s3 = inlined_call_operand.vmem [shape: f32[1,128], index: 3, kind: input, shape index: {}]
  %s4 = inlined_call_operand.hbm [shape: f32[2,16,128], index: 4, kind: output, shape index: {}]
  %s5 = sld [smem:[#allocation0]]
  $region57: #{tpu_custom_call.1} parent=0
    _
  %s7 = ssub.s32 1, %s5
  %s8 = scalar_select 0, %s7, %s5
  $region1: #{tpu_custom_call.1} parent=0
    #allocation2 [shape = 'u8[16384]{0}', space=vmem, size = 0x4000, scoped, tag = 'input window, operand 0']
    #allocation3 [shape = 's32[2]{0}', space=sflag, size = 0x8, scoped, tag = 'scoped memory for tpu_custom_call.1']
    #allocation4 [shape = 's32[2]{0}', space=sflag, size = 0x8, scoped, tag = 'scoped memory for tpu_custom_call.1']
    #allocation5 [shape = 'u8[2048]{0}', space=vmem, size = 0x800, scoped, tag = 'input window, operand 1']
    #allocation6 [shape = 's32[2]{0}', space=sflag, size = 0x8, scoped, tag = 'scoped memory for tpu_custom_call.1']
    #allocation7 [shape = 'u8[16384]{0}', space=vmem, size = 0x4000, scoped, tag = 'output window, operand 0']
    %9 = vsyncpa [#allocation3], 0
    %s10 = scalar_lea.sflag [#allocation3], 1
    %11 = vsyncpa %s10, 0
    %12 = vsyncpa [#allocation6], 0
    %s13 = scalar_lea.sflag [#allocation6], 1
    %14 = vsyncpa %s13, 0
    %15 = vsyncpa [#allocation4], 0
    %s16 = scalar_lea.sflag [#allocation4], 1
    %17 = vsyncpa %s16, 0
    loop: start=0, step=1, limit=4
    $region2: #{tpu_custom_call.1} parent=1 // loop_pre_header
      _
    $region3: #{tpu_custom_call.1} parent=1 // loop_header
      %s19 = sphi 0, %s23
      %p20 = scmp.ge.s32.totalorder %s19, 4
      %s26 = sphi 0, %s38
      %s27 = sphi 0, %s34
      %s28 = sphi 0, %s26
      %s29 = sphi 0, %s27
      %s30 = sphi 0, %s28
      %s31 = sphi 0, %s29
      %s43 = sphi 0, %s45
      %s46 = sphi 0, %s43
      %s47 = sphi 0, %s46
      %s63 = sphi 0, %s47
      %s71 = sphi 0, %s73
      %s74 = sphi 0, %s71
      %s75 = sphi 0, %s74
      %s91 = sphi 0, %s75
      %s95 = sphi 0, %s95
      %s97 = sphi 0, %s95
      %s98 = sphi 0, %s97
      %s112 = sphi 0, %s98
      %s116 = sphi 0, %s116
      %s118 = sphi 0, %s116
      %s119 = sphi 0, %s118
      %s133 = sphi 0, %s119
      %s141 = sphi 0, %s143
      %s144 = sphi 0, %s141
      %s145 = sphi 0, %s144
      %s161 = sphi 0, %s145
    $region4: #{tpu_custom_call.1} parent=1 // loop_header_branch
      %22 = sbr.rel (%p20) target = $region8
    $region5: #{tpu_custom_call.1} parent=1 // loop_body
      %s24 = ssub.s32 %s19, 1
      %s25 = ssub.s32 %s19, 2
      %s32 = sadd.s32 1, %s27
      %p33 = scmp.ge.s32.totalorder %s32, 1
      %s34 = scalar_select %p33, 0, %s32
      %s35 = sadd.s32 1, %s26
      %s36 = scalar_select %p33, %s35, %s26
      %p37 = scmp.ge.s32.totalorder %s36, 2
      %s38 = scalar_select %p37, 0, %s36
      %s39 = ssub.s32 %s26, %s38
      %s40 = ssub.s32 %s27, %s34
      %s41 = sor.u32 %s39, %s40
      %p42 = scmp.eq.s32.totalorder %s41, 0
      %s44 = sadd.s32 %s43, 1
      %s45 = scalar_select %p42, %s43, %s44
      %p48 = pneg %p42
      %p49 = scmp.eq.s32.totalorder %s19, 1
      %p50 = por %p48, %p49
      %p51 = scmp.ne.s32.totalorder %s43, %s46
      %p52 = scmp.eq.s32.totalorder %s19, 0
      %p53 = por %p51, %p52
      %p54 = scmp.ne.s32.totalorder %s43, %s46
      %p55 = scmp.eq.s32.totalorder %s24, 1
      %p56 = por %p54, %p55
      %p57 = scmp.ne.s32.totalorder %s46, %s47
      %p58 = scmp.eq.s32.totalorder %s24, 0
      %p59 = por %p57, %p58
      %p60 = scmp.ne.s32.totalorder %s46, %s47
      %p61 = scmp.eq.s32.totalorder %s25, 1
      %p62 = por %p60, %p61
      %p64 = scmp.ne.s32.totalorder %s47, %s63
      %p65 = scmp.eq.s32.totalorder %s25, 0
      %p66 = por %p64, %p65
      %s67 = ssub.s32 %s26, %s38
      %s68 = ssub.s32 %s27, %s34
      %s69 = sor.u32 %s67, %s68
      %p70 = scmp.eq.s32.totalorder %s69, 0
      %s72 = sadd.s32 %s71, 1
      %s73 = scalar_select %p70, %s71, %s72
      %p76 = pneg %p70
      %p77 = scmp.eq.s32.totalorder %s19, 1
      %p78 = por %p76, %p77
      %p79 = scmp.ne.s32.totalorder %s71, %s74
      %p80 = scmp.eq.s32.totalorder %s19, 0
      %p81 = por %p79, %p80
      %p82 = scmp.ne.s32.totalorder %s71, %s74
      %p83 = scmp.eq.s32.totalorder %s24, 1
      %p84 = por %p82, %p83
      %p85 = scmp.ne.s32.totalorder %s74, %s75
      %p86 = scmp.eq.s32.totalorder %s24, 0
      %p87 = por %p85, %p86
      %p88 = scmp.ne.s32.totalorder %s74, %s75
      %p89 = scmp.eq.s32.totalorder %s25, 1
      %p90 = por %p88, %p89
      %p92 = scmp.ne.s32.totalorder %s75, %s91
      %p93 = scmp.eq.s32.totalorder %s25, 0
      %p94 = por %p92, %p93
      %s96 = sadd.s32 %s95, 1
      %p99 = scmp.eq.s32.totalorder %s19, 1
      %p100 = scmp.ne.s32.totalorder %s95, %s97
      %p101 = scmp.eq.s32.totalorder %s19, 0
      %p102 = por %p100, %p101
      %p103 = scmp.ne.s32.totalorder %s95, %s97
      %p104 = scmp.eq.s32.totalorder %s24, 1
      %p105 = por %p103, %p104
      %p106 = scmp.ne.s32.totalorder %s97, %s98
      %p107 = scmp.eq.s32.totalorder %s24, 0
      %p108 = por %p106, %p107
      %p109 = scmp.ne.s32.totalorder %s97, %s98
      %p110 = scmp.eq.s32.totalorder %s25, 1
      %p111 = por %p109, %p110
      %p113 = scmp.ne.s32.totalorder %s98, %s112
      %p114 = scmp.eq.s32.totalorder %s25, 0
      %p115 = por %p113, %p114
      %s117 = sadd.s32 %s116, 1
      %p120 = scmp.eq.s32.totalorder %s19, 1
      %p121 = scmp.ne.s32.totalorder %s116, %s118
      %p122 = scmp.eq.s32.totalorder %s19, 0
      %p123 = por %p121, %p122
      %p124 = scmp.ne.s32.totalorder %s116, %s118
      %p125 = scmp.eq.s32.totalorder %s24, 1
      %p126 = por %p124, %p125
      %p127 = scmp.ne.s32.totalorder %s118, %s119
      %p128 = scmp.eq.s32.totalorder %s24, 0
      %p129 = por %p127, %p128
      %p130 = scmp.ne.s32.totalorder %s118, %s119
      %p131 = scmp.eq.s32.totalorder %s25, 1
      %p132 = por %p130, %p131
      %p134 = scmp.ne.s32.totalorder %s119, %s133
      %p135 = scmp.eq.s32.totalorder %s25, 0
      %p136 = por %p134, %p135
      %s137 = ssub.s32 %s26, %s38
      %s138 = ssub.s32 %s27, %s34
      %s139 = sor.u32 %s137, %s138
      %p140 = scmp.eq.s32.totalorder %s139, 0
      %s142 = sadd.s32 %s141, 1
      %s143 = scalar_select %p140, %s141, %s142
      %p146 = pneg %p140
      %p147 = scmp.eq.s32.totalorder %s19, 1
      %p148 = por %p146, %p147
      %p149 = scmp.ne.s32.totalorder %s141, %s144
      %p150 = scmp.eq.s32.totalorder %s19, 0
      %p151 = por %p149, %p150
      %p152 = scmp.ne.s32.totalorder %s141, %s144
      %p153 = scmp.eq.s32.totalorder %s24, 1
      %p154 = por %p152, %p153
      %p155 = scmp.ne.s32.totalorder %s144, %s145
      %p156 = scmp.eq.s32.totalorder %s24, 0
      %p157 = por %p155, %p156
      %p158 = scmp.ne.s32.totalorder %s144, %s145
      %p159 = scmp.eq.s32.totalorder %s25, 1
      %p160 = por %p158, %p159
      %p162 = scmp.ne.s32.totalorder %s145, %s161
      %p163 = scmp.eq.s32.totalorder %s25, 0
      %p164 = por %p162, %p163
      %p165 = scmp.le.s32.totalorder 1, %s19
      %p166 = scmp.lt.s32.totalorder %s19, 3
      %p167 = pnand %p165, %p166
      %p168 = pneg %p167
      // Predicated region
      $region9: #{tpu_custom_call.1} parent=5 // pred_check
        _
      $region10: #{tpu_custom_call.1} parent=5 // pred_check_branch
        %170 = sbr.rel (%p167) target = $region12
      $region11: #{tpu_custom_call.1} parent=5 // pred_region
        %s171 = ssub.s32 %s19, 1
        // Predicated region
        $region13: #{tpu_custom_call.1} parent=11 // pred_check
          %p172 = pneg %p108
        $region14: #{tpu_custom_call.1} parent=11 // pred_check_branch
          %174 = sbr.rel (%p172) target = $region16
        $region15: #{tpu_custom_call.1} parent=11 // pred_region
          _
        $region16: #{tpu_custom_call.1} parent=11 // pred_fallthru
          _
        // Predicated region
        $region17: #{tpu_custom_call.1} parent=11 // pred_check
          %p175 = pneg %p129
        $region18: #{tpu_custom_call.1} parent=11 // pred_check_branch
          %177 = sbr.rel (%p175) target = $region20
        $region19: #{tpu_custom_call.1} parent=11 // pred_region
          _
        $region20: #{tpu_custom_call.1} parent=11 // pred_fallthru
          _
      $region12: #{tpu_custom_call.1} parent=5 // pred_fallthru
        _
      %p178 = scmp.lt.s32.totalorder %s19, 2
      // Predicated region
      $region21: #{tpu_custom_call.1} parent=5 // pred_check
        %p179 = pneg %p178
      $region22: #{tpu_custom_call.1} parent=5 // pred_check_branch
        %181 = sbr.rel (%p179) target = $region24
      $region23: #{tpu_custom_call.1} parent=5 // pred_region
        // Predicated region
        $region25: #{tpu_custom_call.1} parent=23 // pred_check
          %p182 = pneg %p53
        $region26: #{tpu_custom_call.1} parent=23 // pred_check_branch
          %184 = sbr.rel (%p182) target = $region28
        $region27: #{tpu_custom_call.1} parent=23 // pred_region
          %s185 = sand.u32 %s43, 1
          %s186 = scalar_lea.sflag [#allocation3], %s185
          %s187 = sand.u32 %s43, 1
          %s188 = smul.addr %s187, 16
          %s189 = scalar_lea.vmem [#allocation2], %s188
          %s190 = smul.u32 2, %s27
          %s192 = ssub.s32 256, 256
          %193 = vsyncadd %s186, %s192
          %s194 = smul.addr %s26, 2
          %s195 = sadd.s32 %s190, %s194
          %s196 = smul.addr %s195, 128
          %s197 = scalar_lea.hbm %s0, %s196
          %s198 = sshll.u32 %s189, 4
          %s199 = int_to_ptr.vmem [resolvable:$true] %s198
          %204 = dma.hbm_to_vmem [thread:$0]  %s197, 256, %s199, %s186, 128, 128, 8
        $region28: #{tpu_custom_call.1} parent=23 // pred_fallthru
          _
        // Predicated region
        $region29: #{tpu_custom_call.1} parent=23 // pred_check
          %p205 = pneg %p81
        $region30: #{tpu_custom_call.1} parent=23 // pred_check_branch
          %207 = sbr.rel (%p205) target = $region32
        $region31: #{tpu_custom_call.1} parent=23 // pred_region
          %s208 = sand.u32 %s71, 1
          %s209 = scalar_lea.sflag [#allocation6], %s208
          %s210 = sand.u32 %s71, 1
          %s211 = smul.addr %s210, 2
          %s212 = scalar_lea.vmem [#allocation5], %s211
          %s214 = ssub.s32 32, 32
          %215 = vsyncadd %s209, %s214
          %s216 = sadd.s32 %s27, %s26
          %s217 = smul.addr %s216, 32
          %s218 = scalar_lea.hbm %s1, %s217
          %s220 = sshll.u32 %s212, 4
          %s221 = int_to_ptr.vmem [resolvable:$true] %s220
          %223 = dma.hbm_to_vmem [thread:$0]  %s218, 32, %s221, %s209
        $region32: #{tpu_custom_call.1} parent=23 // pred_fallthru
          _
      $region24: #{tpu_custom_call.1} parent=5 // pred_fallthru
        _
      %p224 = scmp.le.s32.totalorder 1, %s19
      %p225 = scmp.lt.s32.totalorder %s19, 3
      %p226 = pnand %p224, %p225
      %p227 = pneg %p226
      // Predicated region
      $region33: #{tpu_custom_call.1} parent=5 // pred_check
        _
      $region34: #{tpu_custom_call.1} parent=5 // pred_check_branch
        %229 = sbr.rel (%p226) target = $region36
      $region35: #{tpu_custom_call.1} parent=5 // pred_region
        %s230 = ssub.s32 %s19, 1
        %s231 = sand.u32 %s46, 1
        %s232 = scalar_lea.sflag [#allocation3], %s231
        %s233 = sand.u32 %s46, 1
        %s234 = smul.addr %s233, 16
        %s235 = scalar_lea.vmem [#allocation2], %s234
        // Predicated region
        $region37: #{tpu_custom_call.1} parent=35 // pred_check
          %p236 = pneg %p59
        $region38: #{tpu_custom_call.1} parent=35 // pred_check_branch
          %238 = sbr.rel (%p236) target = $region40
        $region39: #{tpu_custom_call.1} parent=35 // pred_region
          %239 = dma.done %s232, 256
        $region40: #{tpu_custom_call.1} parent=35 // pred_fallthru
          _
        %s240 = sand.u32 %s74, 1
        %s241 = scalar_lea.sflag [#allocation6], %s240
        %s242 = sand.u32 %s74, 1
        %s243 = smul.addr %s242, 2
        %s244 = scalar_lea.vmem [#allocation5], %s243
        // Predicated region
        $region41: #{tpu_custom_call.1} parent=35 // pred_check
          %p245 = pneg %p87
        $region42: #{tpu_custom_call.1} parent=35 // pred_check_branch
          %247 = sbr.rel (%p245) target = $region44
        $region43: #{tpu_custom_call.1} parent=35 // pred_region
          %248 = dma.done %s241, 32
        $region44: #{tpu_custom_call.1} parent=35 // pred_fallthru
          _
        %s249 = sand.u32 %s46, 1
        %s250 = scalar_lea.sflag [#allocation3], %s249
        %s251 = sand.u32 %s46, 1
        %s252 = smul.addr %s251, 16
        %s253 = scalar_lea.vmem [#allocation2], %s252
        %p254 = pneg %p59
        %p255 = pneg %p56
        %s256 = sand.u32 %s74, 1
        %s257 = scalar_lea.sflag [#allocation6], %s256
        %s258 = sand.u32 %s74, 1
        %s259 = smul.addr %s258, 2
        %s260 = scalar_lea.vmem [#allocation5], %s259
        %p261 = pneg %p87
        %p262 = pneg %p84
        %p263 = pneg %p108
        %p264 = pneg %p105
        %p265 = pneg %p129
        %p266 = pneg %p126
        %p267 = pneg %p157
        %p268 = pneg %p154
        %s269 = sand.u32 %s144, 1
        %s270 = scalar_lea.sflag [#allocation4], %s269
        %s271 = sand.u32 %s144, 1
        %s272 = smul.addr %s271, 16
        %s273 = scalar_lea.vmem [#allocation7], %s272
        %s274 = smul.u32 2, %s29
        %s275 = smul.u32 2, %s29
        %v276 = vld [vmem:[%s235] sm:$0xff]
        %v277 = vld [vmem:[%s235 + $0x8] sm:$0xff]
        %v278 = vld [vmem:[%s244] sm:$0x3]
        %v279 = vld [vmem:[%s2] sm:$0x7]
        %v280 = vld [vmem:[%s3] sm:$0x1]
        %v281 = vlaneseq
        %v282 = vshrl.u32 %v281, 7
        %v283 = vadd.s32 %v282, 8
        %vm284 = vcmp.eq.s32.totalorder %v282, 0
        %vm285 = vcmp.eq.s32.totalorder %v283, 0
        %v286 = vrot.slane %v276, 7
        %v287 = vrot.slane %v277, 7
        %vm288 = vcmp.lt.s32.totalorder %v282, 1
        %v289 = vsel %vm288, %v286, %v287
        %v290 = vsel %vm288, %v287, %v286
        %v291 = vsel %vm284, 1, 0
        %v292 = vsel %vm285, 1, 0
        %vm293 = vcmp.eq.s32.totalorder %v291, 1
        %vm294 = vcmp.eq.s32.totalorder %v292, 1
        %v295 = vlaneseq
        %v296 = vshrl.u32 %v295, 7
        %v297 = vsub.s32 0, %v296
        %v298 = vrot.slane %v278, %v297
        %v299 = vsel %vm293, %v298, %v290
        %v300 = vsel %vm294, %v298, %v289
        %vm301 = vcmp.eq.s32.totalorder %v282, 15
        %vm302 = vcmp.eq.s32.totalorder %v283, 15
        %v303 = vrot.slane %v276, 1
        %v304 = vrot.slane %v277, 1
        %vm305 = vcmp.lt.s32.totalorder %v282, 7
        %v306 = vsel %vm305, %v303, %v304
        %v307 = vsel %vm305, %v304, %v303
        %v308 = vsel %vm301, 1, 0
        %v309 = vsel %vm302, 1, 0
        %vm310 = vcmp.eq.s32.totalorder %v308, 1
        %vm311 = vcmp.eq.s32.totalorder %v309, 1
        %v312 = vlaneseq
        %v313 = vshrl.u32 %v312, 7
        %v314 = vsub.s32 1, %v313
        %v315 = vrot.slane %v278, %v314
        %v316 = vsel %vm310, %v315, %v306
        %v317 = vsel %vm311, %v315, %v307
        %v318 = vlaneseq
        %v319 = vshrl.u32 %v318, 7
        %v320 = vsub.s32 0, %v319
        %v321 = vrot.slane %v279, %v320
        %v322 = vmul.f32 %v299, %v321
        %v323 = vmul.f32 %v300, %v321
        %v324 = vlaneseq
        %v325 = vshrl.u32 %v324, 7
        %v326 = vsub.s32 1, %v325
        %v327 = vrot.slane %v279, %v326
        %v328 = vmul.f32 %v276, %v327
        %v329 = vmul.f32 %v277, %v327
        %v330 = vadd.f32 %v322, %v328
        %v331 = vadd.f32 %v323, %v329
        %v332 = vlaneseq
        %v333 = vshrl.u32 %v332, 7
        %v334 = vsub.s32 2, %v333
        %v335 = vrot.slane %v279, %v334
        %v336 = vmul.f32 %v316, %v335
        %v337 = vmul.f32 %v317, %v335
        %v338 = vadd.f32 %v330, %v336
        %v339 = vadd.f32 %v331, %v337
        %v341 = vlaneseq
        %v342 = vshrl.u32 %v341, 7
        %v343 = vsub.s32 0, %v342
        %v344 = vrot.slane %v280, %v343
        %v346 = vadd.f32 %v338, %v344
        %v347 = vadd.f32 %v339, %v344
        %348 = vst [vmem:[%s273] sm:$0xff] %v346
        %349 = vst [vmem:[%s273 + $0x8] sm:$0xff] %v347
        %s350 = sand.u32 %s144, 1
        %s351 = scalar_lea.sflag [#allocation4], %s350
        %s352 = sand.u32 %s144, 1
        %s353 = smul.addr %s352, 16
        %s354 = scalar_lea.vmem [#allocation7], %s353
        // Predicated region
        $region45: #{tpu_custom_call.1} parent=35 // pred_check
          %p355 = pneg %p154
        $region46: #{tpu_custom_call.1} parent=35 // pred_check_branch
          %357 = sbr.rel (%p355) target = $region48
        $region47: #{tpu_custom_call.1} parent=35 // pred_region
          %s358 = smul.u32 2, %s29
          %s360 = ssub.s32 256, 256
          %361 = vsyncadd %s351, %s360
          %s362 = smul.addr %s28, 2
          %s363 = sadd.s32 %s358, %s362
          %s364 = smul.addr %s363, 128
          %s365 = scalar_lea.hbm %s4, %s364
          %s366 = sshll.u32 %s354, 4
          %s367 = int_to_ptr.vmem [resolvable:$true] %s366
          %372 = dma.vmem_to_hbm [thread:$0]  %s367, 256, %s365, %s351, 128, 128, 8
        $region48: #{tpu_custom_call.1} parent=35 // pred_fallthru
          _
      $region36: #{tpu_custom_call.1} parent=5 // pred_fallthru
        _
      %p373 = scmp.le.s32.totalorder 2, %s19
      // Predicated region
      $region49: #{tpu_custom_call.1} parent=5 // pred_check
        %p374 = pneg %p373
      $region50: #{tpu_custom_call.1} parent=5 // pred_check_branch
        %376 = sbr.rel (%p374) target = $region52
      $region51: #{tpu_custom_call.1} parent=5 // pred_region
        %s377 = ssub.s32 %s19, 2
        // Predicated region
        $region53: #{tpu_custom_call.1} parent=51 // pred_check
          %p378 = pneg %p160
        $region54: #{tpu_custom_call.1} parent=51 // pred_check_branch
          %380 = sbr.rel (%p378) target = $region56
        $region55: #{tpu_custom_call.1} parent=51 // pred_region
          %s381 = sand.u32 %s145, 1
          %s382 = scalar_lea.sflag [#allocation4], %s381
          %s383 = sand.u32 %s145, 1
          %s384 = smul.addr %s383, 16
          %s385 = scalar_lea.vmem [#allocation7], %s384
          %386 = dma.done %s382, 256
        $region56: #{tpu_custom_call.1} parent=51 // pred_fallthru
          _
      $region52: #{tpu_custom_call.1} parent=5 // pred_fallthru
        _
    $region6: #{tpu_custom_call.1} parent=1 // loop_footer
      %s23 = sadd.s32 1, %s19
    $region7: #{tpu_custom_call.1} parent=1 // loop_footer_branch
      %18 = sbr.rel target = $region3
    $region8: #{tpu_custom_call.1} parent=1 // loop_exit
      _
    %387 = vsyncpa [#allocation3], 1
    %s388 = scalar_lea.sflag [#allocation3], 1
    %389 = vsyncpa %s388, 1
    %390 = vsyncpa [#allocation6], 1
    %s391 = scalar_lea.sflag [#allocation6], 1
    %392 = vsyncpa %s391, 1
    %393 = vsyncpa [#allocation4], 1
    %s394 = scalar_lea.sflag [#allocation4], 1
    %395 = vsyncpa %s394, 1

</llo_original>
